<compile_context>
chip_gen: v7x
topology: tpu7x:2x2x1
jax: 0.10.0
libtpu: 0.0.40
codegen_flags: <defaults>
</compile_context>

<pallas_src>
import functools

import jax
import jax.numpy as jnp
from jax import lax
from jax.experimental import pallas as pl
from jax.experimental.pallas import tpu as pltpu


def convblock_kernel(xph_ref, w_ref, o_ref, *, use_act: bool):
    """Fused im2col-from-phases -> 3x3/s2 conv matmul -> InstanceNorm -> ReLU.

    xph_ref: (1, 4, Ho+1, Wo+1, Cin)  reflect-padded input, even/odd phase split
    w_ref:   (9*Cin, Cout_pad)        weight slab, rows ordered (kh, kw, cin),
                                      lane-padded output channels (zeros)
    o_ref:   (1, Ho*Wo, Cout_pad)     lane-dense output slab
    """
    _, _, Hp, Wp, Cin = xph_ref.shape
    _, HoWo, Cpad = o_ref.shape
    Ho, Wo = Hp - 1, Wp - 1

    # In-kernel im2col: every tap of the 3x3 stride-2 window is a unit-stride
    # slice of one parity plane (the stride-2 decimation was folded into the
    # wrapper-side phase split).  Lane-concat -> (Ho*Wo, 9*Cin) in VMEM only.
    taps = []
    for kh in range(3):
        for kw in range(3):
            ph = (kh % 2) * 2 + (kw % 2)     # which (row, col) parity plane
            dr, dc = kh // 2, kw // 2        # +1 spatial shift when kh/kw == 2
            taps.append(xph_ref[0, ph, dr:dr + Ho, dc:dc + Wo, :])  # (Ho,Wo,Cin)
    patches = jnp.concatenate(taps, axis=-1).reshape(Ho * Wo, 9 * Cin)

    # Single MXU matmul, K = 9*Cin; operands in w_ref.dtype (bf16 by default,
    # the native MXU dtype on v5e/v6e/v7x), accumulation in f32.
    acc = jnp.dot(patches.astype(w_ref.dtype), w_ref[...],
                  preferred_element_type=jnp.float32)        # (Ho*Wo, Cpad) f32
    # Conv bias intentionally omitted: InstanceNorm2d(affine=False) subtracts
    # the per-channel mean, so a per-channel constant is an exact no-op.

    # InstanceNorm2d (affine=False, eps=1e-5): per-(sample, channel) stats over
    # all spatial positions.  Single traversal; `centered` reused for both the
    # variance and the normalization; epilogue stays in f32.
    inv_n = 1.0 / float(Ho * Wo)
    mean = jnp.sum(acc, axis=0, keepdims=True) * inv_n                 # (1, Cpad)
    centered = acc - mean
    var = jnp.sum(centered * centered, axis=0, keepdims=True) * inv_n  # (1, Cpad)
    y = centered * lax.rsqrt(var + 1e-5)
    # (Zero-weight padding channels: centered == 0 -> y == 0 -> sliced off.)
    if use_act:
        y = jnp.maximum(y, 0.0)
    o_ref[0] = y.astype(o_ref.dtype)   # lane-dense, unmasked store


def conv_block_forward(x_nchw, weight_oihw, bias=None, *,
                       use_act=True, compute_dtype=jnp.bfloat16):
    """Forward of ConvolutionalBlock(in_ch, out_ch, stride=2, down=True, use_act=True)."""
    del bias  # Exact no-op under InstanceNorm2d(affine=False); see kernel comment.
    N, Cin, H, W = x_nchw.shape
    Cout = weight_oihw.shape[0]
    assert H % 2 == 0 and W % 2 == 0, "stride-2 phase split assumes even H, W"
    Ho, Wo = H // 2, W // 2
    Hp, Wp = Ho + 1, Wo + 1

    LANE = 128
    Cpad = ((Cout + LANE - 1) // LANE) * LANE   # lane-dense output channels

    # Single wrapper-side layout pass on the input: NCHW -> NHWC, reflect-pad
    # by 1 (matches padding_mode='reflect'), even/odd phase split.  Same total
    # bytes as the padded input -- the 9x im2col expansion only happens inside
    # the kernel, in VMEM.
    x_nhwc = jnp.transpose(x_nchw, (0, 2, 3, 1))
    xp = jnp.pad(x_nhwc, ((0, 0), (1, 1), (1, 1), (0, 0)), mode="reflect")
    x_ph = (xp.reshape(N, Hp, 2, Wp, 2, Cin)
              .transpose(0, 2, 4, 1, 3, 5)
              .reshape(N, 4, Hp, Wp, Cin))     # x_ph[n, 2r+c, a, b] = xp[n, 2a+r, 2b+c]

    # Weight prep (tiny, once): OIHW -> (kh, kw, cin)-major rows with lane-padded
    # cout columns, cast to the MXU compute dtype.
    w_slab = jnp.transpose(weight_oihw, (2, 3, 1, 0)).reshape(9 * Cin, Cout)
    w_slab = jnp.pad(w_slab, ((0, 0), (0, Cpad - Cout))).astype(compute_dtype)

    kernel = functools.partial(convblock_kernel, use_act=use_act)
    out_slab = pl.pallas_call(
        kernel,
        out_shape=jax.ShapeDtypeStruct((N, Ho * Wo, Cpad), x_nchw.dtype),
        grid=(N,),
        in_specs=[
            pl.BlockSpec((1, 4, Hp, Wp, Cin), lambda n: (n, 0, 0, 0, 0)),
            pl.BlockSpec((9 * Cin, Cpad), lambda n: (0, 0)),
        ],
        out_specs=pl.BlockSpec((1, Ho * Wo, Cpad), lambda n: (n, 0, 0)),
        compiler_params=pltpu.CompilerParams(
            dimension_semantics=("parallel",)),
    )(x_ph, w_slab)

    # Single wrapper-side layout pass on the output: drop channel padding, NCHW.
    out = out_slab.reshape(N, Ho, Wo, Cpad)[:, :, :, :Cout]
    return jnp.transpose(out, (0, 3, 1, 2))


def reference_forward(x_nchw, weight_oihw, bias):
    """Pure-JAX f32 reference with the exact module math (incl. conv bias)."""
    x = jnp.transpose(x_nchw, (0, 2, 3, 1))
    xp = jnp.pad(x, ((0, 0), (1, 1), (1, 1), (0, 0)), mode="reflect")
    w_hwio = jnp.transpose(weight_oihw, (2, 3, 1, 0))
    y = lax.conv_general_dilated(
        xp, w_hwio, window_strides=(2, 2), padding="VALID",
        dimension_numbers=("NHWC", "HWIO", "NHWC"),
        precision=lax.Precision.HIGHEST,
    ) + bias.reshape(1, 1, 1, -1)
    mean = jnp.mean(y, axis=(1, 2), keepdims=True)
    var = jnp.mean((y - mean) ** 2, axis=(1, 2), keepdims=True)
    y = (y - mean) * lax.rsqrt(var + 1e-5)
    y = jnp.maximum(y, 0.0)
    return jnp.transpose(y, (0, 3, 1, 2))


if __name__ == "__main__":
    # Small shapes consistent with the module: batch=2, in=4, out=8, spatial=16.
    N, Cin, Cout, H, W = 2, 4, 8, 16, 16

    key = jax.random.PRNGKey(0)
    kx, kw, kb = jax.random.split(key, 3)
    x = jax.random.normal(kx, (N, Cin, H, W), dtype=jnp.float32)
    # Conv2d parameter shapes: weight (Cout, Cin, 3, 3), bias (Cout,)
    weight = jax.random.normal(kw, (Cout, Cin, 3, 3), dtype=jnp.float32) * 0.1
    bias = jax.random.normal(kb, (Cout,), dtype=jnp.float32) * 0.1

    ref = reference_forward(x, weight, bias)

    # f32 MXU path: tight check against the f32 reference (also proves dropping
    # the conv bias under InstanceNorm(affine=False) is exact math).
    out_f32 = jax.block_until_ready(
        conv_block_forward(x, weight, bias, compute_dtype=jnp.float32))
    assert out_f32.shape == (N, Cout, H // 2, W // 2), out_f32.shape
    assert jnp.allclose(out_f32, ref, atol=1e-3, rtol=1e-3), \
        float(jnp.max(jnp.abs(out_f32 - ref)))

    # Default bf16-operand / f32-accumulate path (native MXU dtype on
    # v5e/v6e/v7x): looser tolerance covers bf16 input/weight rounding.
    out_bf16 = jax.block_until_ready(conv_block_forward(x, weight, bias))
    assert out_bf16.shape == (N, Cout, H // 2, W // 2), out_bf16.shape
    assert jnp.allclose(out_bf16, ref, atol=5e-2, rtol=5e-2), \
        float(jnp.max(jnp.abs(out_bf16 - ref)))

    print("KERNEL_OK")
</pallas_src>

<mosaic_0001>
module attributes {stable_mosaic.version = 11 : i64} {
  func.func @convblock_kernel(%arg0: i32, %arg1: memref<1x4x9x9x4xf32, #tpu.memory_space<vmem>>, %arg2: memref<36x128xf32, #tpu.memory_space<vmem>>, %arg3: memref<1x64x128xf32, #tpu.memory_space<vmem>>) attributes {dimension_semantics = [#tpu.dimension_semantics<parallel>], iteration_bounds = array<i64: 2>, scalar_prefetch = 0 : i64, scratch_operands = 0 : i64, tpu.core_type = #tpu.core_type<tc>, window_params = [{transform_indices = @transform_0, window_bounds = array<i64: 1, 4, 9, 9, 4>}, {pipeline_mode = #tpu.pipeline_mode<synchronous>, transform_indices = @transform_1, window_bounds = array<i64: 36, 128>}, {transform_indices = @transform_2, window_bounds = array<i64: 1, 64, 128>}]} {
    %c0 = arith.constant 0 : index
    %c0_0 = arith.constant 0 : index
    %c0_1 = arith.constant 0 : index
    %c0_2 = arith.constant 0 : index
    %c0_3 = arith.constant 0 : index
    %0 = vector.load %arg1[%c0, %c0_0, %c0_1, %c0_2, %c0_3] : memref<1x4x9x9x4xf32, #tpu.memory_space<vmem>>, vector<1x1x8x8x4xf32>
    %1 = vector.shape_cast %0 : vector<1x1x8x8x4xf32> to vector<8x8x4xf32>
    %c0_4 = arith.constant 0 : index
    %c1 = arith.constant 1 : index
    %c0_5 = arith.constant 0 : index
    %c0_6 = arith.constant 0 : index
    %c0_7 = arith.constant 0 : index
    %2 = vector.load %arg1[%c0_4, %c1, %c0_5, %c0_6, %c0_7] : memref<1x4x9x9x4xf32, #tpu.memory_space<vmem>>, vector<1x1x8x8x4xf32>
    %3 = vector.shape_cast %2 : vector<1x1x8x8x4xf32> to vector<8x8x4xf32>
    %c0_8 = arith.constant 0 : index
    %c0_9 = arith.constant 0 : index
    %c0_10 = arith.constant 0 : index
    %c1_11 = arith.constant 1 : index
    %c0_12 = arith.constant 0 : index
    %4 = vector.load %arg1[%c0_8, %c0_9, %c0_10, %c1_11, %c0_12] : memref<1x4x9x9x4xf32, #tpu.memory_space<vmem>>, vector<1x1x8x8x4xf32>
    %5 = vector.shape_cast %4 : vector<1x1x8x8x4xf32> to vector<8x8x4xf32>
    %c0_13 = arith.constant 0 : index
    %c2 = arith.constant 2 : index
    %c0_14 = arith.constant 0 : index
    %c0_15 = arith.constant 0 : index
    %c0_16 = arith.constant 0 : index
    %6 = vector.load %arg1[%c0_13, %c2, %c0_14, %c0_15, %c0_16] : memref<1x4x9x9x4xf32, #tpu.memory_space<vmem>>, vector<1x1x8x8x4xf32>
    %7 = vector.shape_cast %6 : vector<1x1x8x8x4xf32> to vector<8x8x4xf32>
    %c0_17 = arith.constant 0 : index
    %c3 = arith.constant 3 : index
    %c0_18 = arith.constant 0 : index
    %c0_19 = arith.constant 0 : index
    %c0_20 = arith.constant 0 : index
    %8 = vector.load %arg1[%c0_17, %c3, %c0_18, %c0_19, %c0_20] : memref<1x4x9x9x4xf32, #tpu.memory_space<vmem>>, vector<1x1x8x8x4xf32>
    %9 = vector.shape_cast %8 : vector<1x1x8x8x4xf32> to vector<8x8x4xf32>
    %c0_21 = arith.constant 0 : index
    %c2_22 = arith.constant 2 : index
    %c0_23 = arith.constant 0 : index
    %c1_24 = arith.constant 1 : index
    %c0_25 = arith.constant 0 : index
    %10 = vector.load %arg1[%c0_21, %c2_22, %c0_23, %c1_24, %c0_25] : memref<1x4x9x9x4xf32, #tpu.memory_space<vmem>>, vector<1x1x8x8x4xf32>
    %11 = vector.shape_cast %10 : vector<1x1x8x8x4xf32> to vector<8x8x4xf32>
    %c0_26 = arith.constant 0 : index
    %c0_27 = arith.constant 0 : index
    %c1_28 = arith.constant 1 : index
    %c0_29 = arith.constant 0 : index
    %c0_30 = arith.constant 0 : index
    %12 = vector.load %arg1[%c0_26, %c0_27, %c1_28, %c0_29, %c0_30] : memref<1x4x9x9x4xf32, #tpu.memory_space<vmem>>, vector<1x1x8x8x4xf32>
    %13 = vector.shape_cast %12 : vector<1x1x8x8x4xf32> to vector<8x8x4xf32>
    %c0_31 = arith.constant 0 : index
    %c1_32 = arith.constant 1 : index
    %c1_33 = arith.constant 1 : index
    %c0_34 = arith.constant 0 : index
    %c0_35 = arith.constant 0 : index
    %14 = vector.load %arg1[%c0_31, %c1_32, %c1_33, %c0_34, %c0_35] : memref<1x4x9x9x4xf32, #tpu.memory_space<vmem>>, vector<1x1x8x8x4xf32>
    %15 = vector.shape_cast %14 : vector<1x1x8x8x4xf32> to vector<8x8x4xf32>
    %c0_36 = arith.constant 0 : index
    %c0_37 = arith.constant 0 : index
    %c1_38 = arith.constant 1 : index
    %c1_39 = arith.constant 1 : index
    %c0_40 = arith.constant 0 : index
    %16 = vector.load %arg1[%c0_36, %c0_37, %c1_38, %c1_39, %c0_40] : memref<1x4x9x9x4xf32, #tpu.memory_space<vmem>>, vector<1x1x8x8x4xf32>
    %17 = vector.shape_cast %16 : vector<1x1x8x8x4xf32> to vector<8x8x4xf32>
    %18 = tpu.concatenate %1, %3, %5, %7, %9, %11, %13, %15, %17 in 2 : vector<8x8x4xf32>, vector<8x8x4xf32>, vector<8x8x4xf32>, vector<8x8x4xf32>, vector<8x8x4xf32>, vector<8x8x4xf32>, vector<8x8x4xf32>, vector<8x8x4xf32>, vector<8x8x4xf32> -> vector<8x8x36xf32>
    %19 = vector.shape_cast %18 : vector<8x8x36xf32> to vector<64x36xf32>
    %c0_41 = arith.constant 0 : index
    %c0_42 = arith.constant 0 : index
    %20 = vector.load %arg2[%c0_41, %c0_42] : memref<36x128xf32, #tpu.memory_space<vmem>>, vector<36x128xf32>
    %cst = arith.constant dense<0.000000e+00> : vector<64x128xf32>
    %21 = tpu.matmul %19, %20, %cst {dimension_numbers = #tpu.dot_dimension_numbers<[1], [0], [0], [1], [0, 0, 1, 1], [], []>} : vector<64x36xf32>, vector<36x128xf32>, vector<64x128xf32> -> vector<64x128xf32>
    %cst_43 = arith.constant dense<0.000000e+00> : vector<128xf32>
    %22 = vector.multi_reduction <add>, %21, %cst_43 [0] : vector<64x128xf32> to vector<128xf32>
    %23 = vector.shape_cast %22 : vector<128xf32> to vector<1x128xf32>
    %cst_44 = arith.constant 1.562500e-02 : f32
    %24 = vector.broadcast %cst_44 : f32 to vector<1x128xf32>
    %25 = arith.mulf %23, %24 : vector<1x128xf32>
    %26 = vector.broadcast %25 : vector<1x128xf32> to vector<64x128xf32>
    %27 = arith.subf %21, %26 : vector<64x128xf32>
    %28 = arith.mulf %27, %27 : vector<64x128xf32>
    %cst_45 = arith.constant dense<0.000000e+00> : vector<128xf32>
    %29 = vector.multi_reduction <add>, %28, %cst_45 [0] : vector<64x128xf32> to vector<128xf32>
    %30 = vector.shape_cast %29 : vector<128xf32> to vector<1x128xf32>
    %cst_46 = arith.constant 1.562500e-02 : f32
    %31 = vector.broadcast %cst_46 : f32 to vector<1x128xf32>
    %32 = arith.mulf %30, %31 : vector<1x128xf32>
    %cst_47 = arith.constant 9.99999974E-6 : f32
    %33 = vector.broadcast %cst_47 : f32 to vector<1x128xf32>
    %34 = arith.addf %32, %33 : vector<1x128xf32>
    %35 = math.rsqrt %34 : vector<1x128xf32>
    %36 = vector.broadcast %35 : vector<1x128xf32> to vector<64x128xf32>
    %37 = arith.mulf %27, %36 : vector<64x128xf32>
    %cst_48 = arith.constant 0.000000e+00 : f32
    %38 = vector.broadcast %cst_48 : f32 to vector<64x128xf32>
    %39 = arith.maximumf %37, %38 : vector<64x128xf32>
    %c0_49 = arith.constant 0 : index
    %c0_50 = arith.constant 0 : index
    %c0_51 = arith.constant 0 : index
    %40 = vector.load %arg3[%c0_49, %c0_50, %c0_51] : memref<1x64x128xf32, #tpu.memory_space<vmem>>, vector<1x64x128xf32>
    %41 = vector.shape_cast %40 : vector<1x64x128xf32> to vector<64x128xf32>
    %42 = vector.shape_cast %39 : vector<64x128xf32> to vector<1x64x128xf32>
    tpu.vector_store %arg3[%c0_49, %c0_50, %c0_51], %42 {strides = array<i32>} : memref<1x64x128xf32, #tpu.memory_space<vmem>>, vector<1x64x128xf32>,
    return
  }
  func.func @transform_0(%arg0: i32) -> (i32, i32, i32, i32, i32) {
    %c0_i32 = arith.constant 0 : i32
    %c0_i32_0 = arith.constant 0 : i32
    %c0_i32_1 = arith.constant 0 : i32
    %c0_i32_2 = arith.constant 0 : i32
    %c0_i32_3 = arith.constant 0 : i32
    return %arg0, %c0_i32, %c0_i32_0, %c0_i32_1, %c0_i32_2 : i32, i32, i32, i32, i32
  }
  func.func @transform_1(%arg0: i32) -> (i32, i32) {
    %c0_i32 = arith.constant 0 : i32
    %c0_i32_0 = arith.constant 0 : i32
    %c0_i32_1 = arith.constant 0 : i32
    return %c0_i32, %c0_i32_0 : i32, i32
  }
  func.func @transform_2(%arg0: i32) -> (i32, i32, i32) {
    %c0_i32 = arith.constant 0 : i32
    %c0_i32_0 = arith.constant 0 : i32
    %c0_i32_1 = arith.constant 0 : i32
    return %arg0, %c0_i32, %c0_i32_0 : i32, i32, i32
  }
}

</mosaic_0001>

<llo_original>
// kernel: tpu_custom_call.1
$region0: #{tpu_custom_call.1}
  #allocation0 [shape = 'u32[]', space=smem, size = 0x4, offset = 0x4, fixed_abs, tag = 'smem constant byte address 0x4 - core index']
  #allocation1 [shape = 'u32[144,128]{1,0:T(1,128)}', space=vmem, size = 0x12000, scoped, tag = 'internal scratch']
  %s0 = inlined_call_operand.vmem [shape: f32[2,4,9,9,4], index: 0, kind: input, shape index: {}]
  %s1 = inlined_call_operand.vmem [shape: f32[36,128], index: 1, kind: input, shape index: {}]
  %s2 = inlined_call_operand.hbm [shape: f32[2,64,128], index: 2, kind: output, shape index: {}]
  %s3 = sld [smem:[#allocation0]]
  $region41: #{tpu_custom_call.1} parent=0
    _
  %s5 = ssub.s32 1, %s3
  %s6 = scalar_select 0, %s5, %s3
  $region1: #{tpu_custom_call.1} parent=0
    #allocation2 [shape = 'u8[65536]{0}', space=vmem, size = 0x10000, scoped, tag = 'output window, operand 0']
    #allocation3 [shape = 's32[2]{0}', space=sflag, size = 0x8, scoped, tag = 'scoped memory for tpu_custom_call.1']
    %7 = vsyncpa [#allocation3], 0
    %s8 = scalar_lea.sflag [#allocation3], 1
    %9 = vsyncpa %s8, 0
    loop: start=0, step=1, limit=4
    $region2: #{tpu_custom_call.1} parent=1 // loop_pre_header
      _
    $region3: #{tpu_custom_call.1} parent=1 // loop_header
      %s11 = sphi 0, %s15
      %p12 = scmp.ge.s32.totalorder %s11, 4
      %s21 = sphi 0, %s23
      %s24 = sphi 0, %s21
      %s25 = sphi 0, %s24
      %s41 = sphi 0, %s25
      %s45 = sphi 0, %s45
      %s47 = sphi 0, %s45
      %s48 = sphi 0, %s47
      %s62 = sphi 0, %s48
      %s68 = sphi 0, %s70
      %s71 = sphi 0, %s68
      %s72 = sphi 0, %s71
      %s88 = sphi 0, %s72
    $region4: #{tpu_custom_call.1} parent=1 // loop_header_branch
      %14 = sbr.rel (%p12) target = $region8
    $region5: #{tpu_custom_call.1} parent=1 // loop_body
      %s16 = ssub.s32 %s11, 1
      %s17 = ssub.s32 %s11, 2
      %s18 = sadd.s32 %s11, 1
      %s19 = ssub.s32 %s11, %s18
      %p20 = scmp.eq.s32.totalorder %s19, 0
      %s22 = sadd.s32 %s21, 1
      %s23 = scalar_select %p20, %s21, %s22
      %p26 = pneg %p20
      %p27 = scmp.eq.s32.totalorder %s11, 1
      %p28 = por %p26, %p27
      %p29 = scmp.ne.s32.totalorder %s21, %s24
      %p30 = scmp.eq.s32.totalorder %s11, 0
      %p31 = por %p29, %p30
      %p32 = scmp.ne.s32.totalorder %s21, %s24
      %p33 = scmp.eq.s32.totalorder %s16, 1
      %p34 = por %p32, %p33
      %p35 = scmp.ne.s32.totalorder %s24, %s25
      %p36 = scmp.eq.s32.totalorder %s16, 0
      %p37 = por %p35, %p36
      %p38 = scmp.ne.s32.totalorder %s24, %s25
      %p39 = scmp.eq.s32.totalorder %s17, 1
      %p40 = por %p38, %p39
      %p42 = scmp.ne.s32.totalorder %s25, %s41
      %p43 = scmp.eq.s32.totalorder %s17, 0
      %p44 = por %p42, %p43
      %s46 = sadd.s32 %s45, 1
      %p49 = scmp.eq.s32.totalorder %s11, 1
      %p50 = scmp.ne.s32.totalorder %s45, %s47
      %p51 = scmp.eq.s32.totalorder %s11, 0
      %p52 = por %p50, %p51
      %p53 = scmp.ne.s32.totalorder %s45, %s47
      %p54 = scmp.eq.s32.totalorder %s16, 1
      %p55 = por %p53, %p54
      %p56 = scmp.ne.s32.totalorder %s47, %s48
      %p57 = scmp.eq.s32.totalorder %s16, 0
      %p58 = por %p56, %p57
      %p59 = scmp.ne.s32.totalorder %s47, %s48
      %p60 = scmp.eq.s32.totalorder %s17, 1
      %p61 = por %p59, %p60
      %p63 = scmp.ne.s32.totalorder %s48, %s62
      %p64 = scmp.eq.s32.totalorder %s17, 0
      %p65 = por %p63, %p64
      %s66 = ssub.s32 %s11, %s18
      %p67 = scmp.eq.s32.totalorder %s66, 0
      %s69 = sadd.s32 %s68, 1
      %s70 = scalar_select %p67, %s68, %s69
      %p73 = pneg %p67
      %p74 = scmp.eq.s32.totalorder %s11, 1
      %p75 = por %p73, %p74
      %p76 = scmp.ne.s32.totalorder %s68, %s71
      %p77 = scmp.eq.s32.totalorder %s11, 0
      %p78 = por %p76, %p77
      %p79 = scmp.ne.s32.totalorder %s68, %s71
      %p80 = scmp.eq.s32.totalorder %s16, 1
      %p81 = por %p79, %p80
      %p82 = scmp.ne.s32.totalorder %s71, %s72
      %p83 = scmp.eq.s32.totalorder %s16, 0
      %p84 = por %p82, %p83
      %p85 = scmp.ne.s32.totalorder %s71, %s72
      %p86 = scmp.eq.s32.totalorder %s17, 1
      %p87 = por %p85, %p86
      %p89 = scmp.ne.s32.totalorder %s72, %s88
      %p90 = scmp.eq.s32.totalorder %s17, 0
      %p91 = por %p89, %p90
      %p92 = scmp.le.s32.totalorder 1, %s11
      %p93 = scmp.lt.s32.totalorder %s11, 3
      %p94 = pnand %p92, %p93
      %p95 = pneg %p94
      // Predicated region
      $region9: #{tpu_custom_call.1} parent=5 // pred_check
        _
      $region10: #{tpu_custom_call.1} parent=5 // pred_check_branch
        %97 = sbr.rel (%p94) target = $region12
      $region11: #{tpu_custom_call.1} parent=5 // pred_region
        %s98 = ssub.s32 %s11, 1
        // Predicated region
        $region13: #{tpu_custom_call.1} parent=11 // pred_check
          %p99 = pneg %p58
        $region14: #{tpu_custom_call.1} parent=11 // pred_check_branch
          %101 = sbr.rel (%p99) target = $region16
        $region15: #{tpu_custom_call.1} parent=11 // pred_region
          _
        $region16: #{tpu_custom_call.1} parent=11 // pred_fallthru
          _
      $region12: #{tpu_custom_call.1} parent=5 // pred_fallthru
        _
      %p102 = scmp.lt.s32.totalorder %s11, 2
      // Predicated region
      $region17: #{tpu_custom_call.1} parent=5 // pred_check
        %p103 = pneg %p102
      $region18: #{tpu_custom_call.1} parent=5 // pred_check_branch
        %105 = sbr.rel (%p103) target = $region20
      $region19: #{tpu_custom_call.1} parent=5 // pred_region
        // Predicated region
        $region21: #{tpu_custom_call.1} parent=19 // pred_check
          %p106 = pneg %p31
        $region22: #{tpu_custom_call.1} parent=19 // pred_check_branch
          %108 = sbr.rel (%p106) target = $region24
        $region23: #{tpu_custom_call.1} parent=19 // pred_region
          %p109 = scmp.lt.s32.totalorder %s11, 1
          %s110 = scalar_select %p109, %s11, 1
          %s111 = smul.addr %s110, 72
          %s112 = smul.addr %s111, 8
          %s113 = scalar_lea.vmem %s0, %s112
        $region24: #{tpu_custom_call.1} parent=19 // pred_fallthru
          _
      $region20: #{tpu_custom_call.1} parent=5 // pred_fallthru
        _
      %p114 = scmp.le.s32.totalorder 1, %s11
      %p115 = scmp.lt.s32.totalorder %s11, 3
      %p116 = pnand %p114, %p115
      %p117 = pneg %p116
      // Predicated region
      $region25: #{tpu_custom_call.1} parent=5 // pred_check
        _
      $region26: #{tpu_custom_call.1} parent=5 // pred_check_branch
        %119 = sbr.rel (%p116) target = $region28
      $region27: #{tpu_custom_call.1} parent=5 // pred_region
        %s120 = ssub.s32 %s11, 1
        %p121 = scmp.lt.s32.totalorder %s16, 1
        %s122 = scalar_select %p121, %s16, 1
        %s123 = smul.addr %s122, 72
        %s124 = smul.addr %s123, 8
        %s125 = scalar_lea.vmem %s0, %s124
        %p126 = pneg %p37
        %p127 = pneg %p34
        %p128 = pneg %p58
        %p129 = pneg %p55
        %p130 = pneg %p84
        %p131 = pneg %p81
        %s132 = sand.u32 %s71, 1
        %s133 = scalar_lea.sflag [#allocation3], %s132
        %s134 = sand.u32 %s71, 1
        %s135 = smul.addr %s134, 64
        %s136 = scalar_lea.vmem [#allocation2], %s135
        %p137 = scmp.lt.s32.totalorder %s16, 1
        %s138 = scalar_select %p137, %s16, 1
        %s139 = smul.addr %s138, 72
        %s140 = smul.addr %s139, 8
        %s141 = scalar_lea.vmem %s0, %s140
        %v142 = vld [vmem:[%s141] sm:$0xff]
        %v143 = vld [vmem:[%s141 + $0x10] sm:$0xff]
        %v144 = vld [vmem:[%s141 + $0x20] sm:$0xff]
        %v145 = vld [vmem:[%s141 + $0x30] sm:$0xff]
        %v146 = vld [vmem:[%s141 + $0x40] sm:$0xff]
        %v147 = vld [vmem:[%s141 + $0x50] sm:$0xff]
        %v148 = vld [vmem:[%s141 + $0x60] sm:$0xff]
        %v149 = vld [vmem:[%s141 + $0x70] sm:$0xff]
        %s150 = scalar_lea.vmem %s141, 144
        %v151 = vld [vmem:[%s150] sm:$0xff]
        %v152 = vld [vmem:[%s150 + $0x10] sm:$0xff]
        %v153 = vld [vmem:[%s150 + $0x20] sm:$0xff]
        %v154 = vld [vmem:[%s150 + $0x30] sm:$0xff]
        %v155 = vld [vmem:[%s150 + $0x40] sm:$0xff]
        %v156 = vld [vmem:[%s150 + $0x50] sm:$0xff]
        %v157 = vld [vmem:[%s150 + $0x60] sm:$0xff]
        %v158 = vld [vmem:[%s150 + $0x70] sm:$0xff]
        %v159 = vld [vmem:[%s141 + $0x1] sm:$0xff]
        %v160 = vld [vmem:[%s141 + $0x11] sm:$0xff]
        %v161 = vld [vmem:[%s141 + $0x21] sm:$0xff]
        %v162 = vld [vmem:[%s141 + $0x31] sm:$0xff]
        %v163 = vld [vmem:[%s141 + $0x41] sm:$0xff]
        %v164 = vld [vmem:[%s141 + $0x51] sm:$0xff]
        %v165 = vld [vmem:[%s141 + $0x61] sm:$0xff]
        %v166 = vld [vmem:[%s141 + $0x71] sm:$0xff]
        %s167 = scalar_lea.vmem %s141, 288
        %v168 = vld [vmem:[%s167] sm:$0xff]
        %v169 = vld [vmem:[%s167 + $0x10] sm:$0xff]
        %v170 = vld [vmem:[%s167 + $0x20] sm:$0xff]
        %v171 = vld [vmem:[%s167 + $0x30] sm:$0xff]
        %v172 = vld [vmem:[%s167 + $0x40] sm:$0xff]
        %v173 = vld [vmem:[%s167 + $0x50] sm:$0xff]
        %v174 = vld [vmem:[%s167 + $0x60] sm:$0xff]
        %v175 = vld [vmem:[%s167 + $0x70] sm:$0xff]
        %s176 = scalar_lea.vmem %s141, 432
        %v177 = vld [vmem:[%s176] sm:$0xff]
        %v178 = vld [vmem:[%s176 + $0x10] sm:$0xff]
        %v179 = vld [vmem:[%s176 + $0x20] sm:$0xff]
        %v180 = vld [vmem:[%s176 + $0x30] sm:$0xff]
        %v181 = vld [vmem:[%s176 + $0x40] sm:$0xff]
        %v182 = vld [vmem:[%s176 + $0x50] sm:$0xff]
        %v183 = vld [vmem:[%s176 + $0x60] sm:$0xff]
        %v184 = vld [vmem:[%s176 + $0x70] sm:$0xff]
        %v185 = vld [vmem:[%s167 + $0x1] sm:$0xff]
        %v186 = vld [vmem:[%s167 + $0x11] sm:$0xff]
        %v187 = vld [vmem:[%s167 + $0x21] sm:$0xff]
        %v188 = vld [vmem:[%s167 + $0x31] sm:$0xff]
        %v189 = vld [vmem:[%s167 + $0x41] sm:$0xff]
        %v190 = vld [vmem:[%s167 + $0x51] sm:$0xff]
        %v191 = vld [vmem:[%s167 + $0x61] sm:$0xff]
        %v192 = vld [vmem:[%s167 + $0x71] sm:$0xff]
        %s193 = scalar_lea.vmem %s141, 16
        %v194 = vld [vmem:[%s193] sm:$0xff]
        %v195 = vld [vmem:[%s193 + $0x10] sm:$0xff]
        %v196 = vld [vmem:[%s193 + $0x20] sm:$0xff]
        %v197 = vld [vmem:[%s193 + $0x30] sm:$0xff]
        %v198 = vld [vmem:[%s193 + $0x40] sm:$0xff]
        %v199 = vld [vmem:[%s193 + $0x50] sm:$0xff]
        %v200 = vld [vmem:[%s193 + $0x60] sm:$0xff]
        %v201 = vld [vmem:[%s193 + $0x70] sm:$0xff]
        %s202 = scalar_lea.vmem %s141, 160
        %v203 = vld [vmem:[%s202] sm:$0xff]
        %v204 = vld [vmem:[%s202 + $0x10] sm:$0xff]
        %v205 = vld [vmem:[%s202 + $0x20] sm:$0xff]
        %v206 = vld [vmem:[%s202 + $0x30] sm:$0xff]
        %v207 = vld [vmem:[%s202 + $0x40] sm:$0xff]
        %v208 = vld [vmem:[%s202 + $0x50] sm:$0xff]
        %v209 = vld [vmem:[%s202 + $0x60] sm:$0xff]
        %v210 = vld [vmem:[%s202 + $0x70] sm:$0xff]
        %v211 = vld [vmem:[%s193 + $0x1] sm:$0xff]
        %v212 = vld [vmem:[%s193 + $0x11] sm:$0xff]
        %v213 = vld [vmem:[%s193 + $0x21] sm:$0xff]
        %v214 = vld [vmem:[%s193 + $0x31] sm:$0xff]
        %v215 = vld [vmem:[%s193 + $0x41] sm:$0xff]
        %v216 = vld [vmem:[%s193 + $0x51] sm:$0xff]
        %v217 = vld [vmem:[%s193 + $0x61] sm:$0xff]
        %v218 = vld [vmem:[%s193 + $0x71] sm:$0xff]
        %227 = vrot.lane.b32.xlu0 %v151, 4
        %v228 = vpop.permute.xlu0 %227
        %229 = vrot.lane.b32.xlu0 %v152, 4
        %v230 = vpop.permute.xlu0 %229
        %231 = vrot.lane.b32.xlu0 %v153, 4
        %v232 = vpop.permute.xlu0 %231
        %233 = vrot.lane.b32.xlu0 %v154, 4
        %v234 = vpop.permute.xlu0 %233
        %235 = vrot.lane.b32.xlu0 %v155, 4
        %v236 = vpop.permute.xlu0 %235
        %237 = vrot.lane.b32.xlu0 %v156, 4
        %v238 = vpop.permute.xlu0 %237
        %239 = vrot.lane.b32.xlu0 %v157, 4
        %v240 = vpop.permute.xlu0 %239
        %241 = vrot.lane.b32.xlu0 %v158, 4
        %v242 = vpop.permute.xlu0 %241
        %259 = vrot.lane.b32.xlu0 %v159, 8
        %v260 = vpop.permute.xlu0 %259
        %261 = vrot.lane.b32.xlu0 %v160, 8
        %v262 = vpop.permute.xlu0 %261
        %263 = vrot.lane.b32.xlu0 %v161, 8
        %v264 = vpop.permute.xlu0 %263
        %265 = vrot.lane.b32.xlu0 %v162, 8
        %v266 = vpop.permute.xlu0 %265
        %267 = vrot.lane.b32.xlu0 %v163, 8
        %v268 = vpop.permute.xlu0 %267
        %269 = vrot.lane.b32.xlu0 %v164, 8
        %v270 = vpop.permute.xlu0 %269
        %271 = vrot.lane.b32.xlu0 %v165, 8
        %v272 = vpop.permute.xlu0 %271
        %273 = vrot.lane.b32.xlu0 %v166, 8
        %v274 = vpop.permute.xlu0 %273
        %291 = vrot.lane.b32.xlu0 %v168, 12
        %v292 = vpop.permute.xlu0 %291
        %293 = vrot.lane.b32.xlu0 %v169, 12
        %v294 = vpop.permute.xlu0 %293
        %295 = vrot.lane.b32.xlu0 %v170, 12
        %v296 = vpop.permute.xlu0 %295
        %297 = vrot.lane.b32.xlu0 %v171, 12
        %v298 = vpop.permute.xlu0 %297
        %299 = vrot.lane.b32.xlu0 %v172, 12
        %v300 = vpop.permute.xlu0 %299
        %301 = vrot.lane.b32.xlu0 %v173, 12
        %v302 = vpop.permute.xlu0 %301
        %303 = vrot.lane.b32.xlu0 %v174, 12
        %v304 = vpop.permute.xlu0 %303
        %305 = vrot.lane.b32.xlu0 %v175, 12
        %v306 = vpop.permute.xlu0 %305
        %323 = vrot.lane.b32.xlu0 %v177, 16
        %v324 = vpop.permute.xlu0 %323
        %325 = vrot.lane.b32.xlu0 %v178, 16
        %v326 = vpop.permute.xlu0 %325
        %327 = vrot.lane.b32.xlu0 %v179, 16
        %v328 = vpop.permute.xlu0 %327
        %329 = vrot.lane.b32.xlu0 %v180, 16
        %v330 = vpop.permute.xlu0 %329
        %331 = vrot.lane.b32.xlu0 %v181, 16
        %v332 = vpop.permute.xlu0 %331
        %333 = vrot.lane.b32.xlu0 %v182, 16
        %v334 = vpop.permute.xlu0 %333
        %335 = vrot.lane.b32.xlu0 %v183, 16
        %v336 = vpop.permute.xlu0 %335
        %337 = vrot.lane.b32.xlu0 %v184, 16
        %v338 = vpop.permute.xlu0 %337
        %355 = vrot.lane.b32.xlu0 %v185, 20
        %v356 = vpop.permute.xlu0 %355
        %357 = vrot.lane.b32.xlu0 %v186, 20
        %v358 = vpop.permute.xlu0 %357
        %359 = vrot.lane.b32.xlu0 %v187, 20
        %v360 = vpop.permute.xlu0 %359
        %361 = vrot.lane.b32.xlu0 %v188, 20
        %v362 = vpop.permute.xlu0 %361
        %363 = vrot.lane.b32.xlu0 %v189, 20
        %v364 = vpop.permute.xlu0 %363
        %365 = vrot.lane.b32.xlu0 %v190, 20
        %v366 = vpop.permute.xlu0 %365
        %367 = vrot.lane.b32.xlu0 %v191, 20
        %v368 = vpop.permute.xlu0 %367
        %369 = vrot.lane.b32.xlu0 %v192, 20
        %v370 = vpop.permute.xlu0 %369
        %387 = vrot.lane.b32.xlu0 %v194, 24
        %v388 = vpop.permute.xlu0 %387
        %389 = vrot.lane.b32.xlu0 %v195, 24
        %v390 = vpop.permute.xlu0 %389
        %391 = vrot.lane.b32.xlu0 %v196, 24
        %v392 = vpop.permute.xlu0 %391
        %393 = vrot.lane.b32.xlu0 %v197, 24
        %v394 = vpop.permute.xlu0 %393
        %395 = vrot.lane.b32.xlu0 %v198, 24
        %v396 = vpop.permute.xlu0 %395
        %397 = vrot.lane.b32.xlu0 %v199, 24
        %v398 = vpop.permute.xlu0 %397
        %399 = vrot.lane.b32.xlu0 %v200, 24
        %v400 = vpop.permute.xlu0 %399
        %401 = vrot.lane.b32.xlu0 %v201, 24
        %v402 = vpop.permute.xlu0 %401
        %419 = vrot.lane.b32.xlu0 %v203, 28
        %v420 = vpop.permute.xlu0 %419
        %421 = vrot.lane.b32.xlu0 %v204, 28
        %v422 = vpop.permute.xlu0 %421
        %423 = vrot.lane.b32.xlu0 %v205, 28
        %v424 = vpop.permute.xlu0 %423
        %425 = vrot.lane.b32.xlu0 %v206, 28
        %v426 = vpop.permute.xlu0 %425
        %427 = vrot.lane.b32.xlu0 %v207, 28
        %v428 = vpop.permute.xlu0 %427
        %429 = vrot.lane.b32.xlu0 %v208, 28
        %v430 = vpop.permute.xlu0 %429
        %431 = vrot.lane.b32.xlu0 %v209, 28
        %v432 = vpop.permute.xlu0 %431
        %433 = vrot.lane.b32.xlu0 %v210, 28
        %v434 = vpop.permute.xlu0 %433
        %451 = vrot.lane.b32.xlu0 %v211, 32
        %v452 = vpop.permute.xlu0 %451
        %453 = vrot.lane.b32.xlu0 %v212, 32
        %v454 = vpop.permute.xlu0 %453
        %455 = vrot.lane.b32.xlu0 %v213, 32
        %v456 = vpop.permute.xlu0 %455
        %457 = vrot.lane.b32.xlu0 %v214, 32
        %v458 = vpop.permute.xlu0 %457
        %459 = vrot.lane.b32.xlu0 %v215, 32
        %v460 = vpop.permute.xlu0 %459
        %461 = vrot.lane.b32.xlu0 %v216, 32
        %v462 = vpop.permute.xlu0 %461
        %463 = vrot.lane.b32.xlu0 %v217, 32
        %v464 = vpop.permute.xlu0 %463
        %465 = vrot.lane.b32.xlu0 %v218, 32
        %v466 = vpop.permute.xlu0 %465
        %vm475 = vcmask 31744
        %v476 = vsel %vm475, %v142, %v228
        %v477 = vsel %vm475, %v143, %v230
        %v478 = vsel %vm475, %v144, %v232
        %v479 = vsel %vm475, %v145, %v234
        %v480 = vsel %vm475, %v146, %v236
        %v481 = vsel %vm475, %v147, %v238
        %v482 = vsel %vm475, %v148, %v240
        %v483 = vsel %vm475, %v149, %v242
        %vm484 = vcmask 64512
        %v485 = vsel %vm484, %v476, %v260
        %v486 = vsel %vm484, %v477, %v262
        %v487 = vsel %vm484, %v478, %v264
        %v488 = vsel %vm484, %v479, %v266
        %v489 = vsel %vm484, %v480, %v268
        %v490 = vsel %vm484, %v481, %v270
        %v491 = vsel %vm484, %v482, %v272
        %v492 = vsel %vm484, %v483, %v274
        %vm493 = vcmask 97280
        %v494 = vsel %vm493, %v485, %v292
        %v495 = vsel %vm493, %v486, %v294
        %v496 = vsel %vm493, %v487, %v296
        %v497 = vsel %vm493, %v488, %v298
        %v498 = vsel %vm493, %v489, %v300
        %v499 = vsel %vm493, %v490, %v302
        %v500 = vsel %vm493, %v491, %v304
        %v501 = vsel %vm493, %v492, %v306
        %vm502 = vcmask 130048
        %v503 = vsel %vm502, %v494, %v324
        %v504 = vsel %vm502, %v495, %v326
        %v505 = vsel %vm502, %v496, %v328
        %v506 = vsel %vm502, %v497, %v330
        %v507 = vsel %vm502, %v498, %v332
        %v508 = vsel %vm502, %v499, %v334
        %v509 = vsel %vm502, %v500, %v336
        %v510 = vsel %vm502, %v501, %v338
        %vm511 = vcmask 162816
        %v512 = vsel %vm511, %v503, %v356
        %v513 = vsel %vm511, %v504, %v358
        %v514 = vsel %vm511, %v505, %v360
        %v515 = vsel %vm511, %v506, %v362
        %v516 = vsel %vm511, %v507, %v364
        %v517 = vsel %vm511, %v508, %v366
        %v518 = vsel %vm511, %v509, %v368
        %v519 = vsel %vm511, %v510, %v370
        %vm520 = vcmask 195584
        %v521 = vsel %vm520, %v512, %v388
        %v522 = vsel %vm520, %v513, %v390
        %v523 = vsel %vm520, %v514, %v392
        %v524 = vsel %vm520, %v515, %v394
        %v525 = vsel %vm520, %v516, %v396
        %v526 = vsel %vm520, %v517, %v398
        %v527 = vsel %vm520, %v518, %v400
        %v528 = vsel %vm520, %v519, %v402
        %vm529 = vcmask 228352
        %v530 = vsel %vm529, %v521, %v420
        %v531 = vsel %vm529, %v522, %v422
        %v532 = vsel %vm529, %v523, %v424
        %v533 = vsel %vm529, %v524, %v426
        %v534 = vsel %vm529, %v525, %v428
        %v535 = vsel %vm529, %v526, %v430
        %v536 = vsel %vm529, %v527, %v432
        %v537 = vsel %vm529, %v528, %v434
        %vm538 = vcmask 261120
        %v539 = vsel %vm538, %v530, %v452
        %v540 = vsel %vm538, %v531, %v454
        %v541 = vsel %vm538, %v532, %v456
        %v542 = vsel %vm538, %v533, %v458
        %v543 = vsel %vm538, %v534, %v460
        %v544 = vsel %vm538, %v535, %v462
        %v545 = vsel %vm538, %v536, %v464
        %v546 = vsel %vm538, %v537, %v466
        %v547 = vld [vmem:[%s1] sm:$0xff]
        %v548 = vld [vmem:[%s1 + $0x8] sm:$0xff]
        %v549 = vld [vmem:[%s1 + $0x10] sm:$0xff]
        %v550 = vld [vmem:[%s1 + $0x18] sm:$0xff]
        %v551 = vld [vmem:[%s1 + $0x20] sm:$0xf]
        %vm552 = vcmask 293888
        %v554 = vsel %vm552, %v539, 0
        %v557 = vsel %vm552, %v540, 0
        %v560 = vsel %vm552, %v541, 0
        %v563 = vsel %vm552, %v542, 0
        %v566 = vsel %vm552, %v543, 0
        %v569 = vsel %vm552, %v544, 0
        %v572 = vsel %vm552, %v545, 0
        %v575 = vsel %vm552, %v546, 0
        %vm577 = vcmask 1043456
        %v579 = vsel %vm577, %v551, 0
        %581 = vmatprep.subr.mxu0 0.0
        %582 = vmatpush1.msra.mxu0 %v547
        %583 = vmatprep.subr.mxu0 0.0
        %584 = vmatpush1.msra.mxu0 %v548
        %585 = vmatprep.subr.mxu0 0.0
        %586 = vmatpush1.msra.mxu0 %v549
        %587 = vmatprep.subr.mxu0 0.0
        %588 = vmatpush1.msra.mxu0 %v550
        %589 = vmatprep.subr.mxu0 0.0
        %590 = vmatpush1.msra.mxu0 %v579
        %591 = vmatprep.subr.mxu0 0.0
        %592 = vmatpush1.msra.mxu0 0.0
        %593 = vmatprep.subr.mxu0 0.0
        %594 = vmatpush1.msra.mxu0 0.0
        %595 = vmatprep.subr.mxu0 0.0
        %596 = vmatpush1.msra.mxu0 0.0
        %597 = vmatprep.subr.mxu0 0.0
        %598 = vmatpush1.msra.mxu0 0.0
        %599 = vmatprep.subr.mxu0 0.0
        %600 = vmatpush1.msra.mxu0 0.0
        %601 = vmatprep.subr.mxu0 0.0
        %602 = vmatpush1.msra.mxu0 0.0
        %603 = vmatprep.subr.mxu0 0.0
        %604 = vmatpush1.msra.mxu0 0.0
        %605 = vmatprep.subr.mxu0 0.0
        %606 = vmatpush1.msra.mxu0 0.0
        %607 = vmatprep.subr.mxu0 0.0
        %608 = vmatpush1.msra.mxu0 0.0
        %609 = vmatprep.subr.mxu0 0.0
        %610 = vmatpush1.msra.mxu0 0.0
        %611 = vmatprep.subr.mxu0 0.0
        %612 = vmatpush1.msra.mxu0 0.0
        %613 = vmatprep.subr.mxu0 0.0
        %614 = vmatpush1.msra.mxu0 0.0
        %615 = vmatprep.subr.mxu0 0.0
        %616 = vmatpush1.msra.mxu0 0.0
        %617 = vmatprep.subr.mxu0 0.0
        %618 = vmatpush1.msra.mxu0 0.0
        %619 = vmatprep.subr.mxu0 0.0
        %620 = vmatpush1.msra.mxu0 0.0
        %621 = vmatprep.subr.mxu0 0.0
        %622 = vmatpush1.msra.mxu0 0.0
        %623 = vmatprep.subr.mxu0 0.0
        %624 = vmatpush1.msra.mxu0 0.0
        %625 = vmatprep.subr.mxu0 0.0
        %626 = vmatpush1.msra.mxu0 0.0
        %627 = vmatprep.subr.mxu0 0.0
        %628 = vmatpush1.msra.mxu0 0.0
        %629 = vmatprep.subr.mxu0 0.0
        %630 = vmatpush1.msra.mxu0 0.0
        %631 = vmatprep.subr.mxu0 0.0
        %632 = vmatpush1.msra.mxu0 0.0
        %633 = vmatprep.subr.mxu0 0.0
        %634 = vmatpush1.msra.mxu0 0.0
        %635 = vmatprep.subr.mxu0 0.0
        %636 = vmatpush1.msra.mxu0 0.0
        %637 = vmatprep.subr.mxu0 0.0
        %638 = vmatpush1.msra.mxu0 0.0
        %639 = vmatprep.subr.mxu0 0.0
        %640 = vmatpush1.msra.mxu0 0.0
        %641 = vmatprep.subr.mxu0 0.0
        %642 = vmatpush1.msra.mxu0 0.0
        %643 = vmatprep.subr.mxu0 0.0
        %644 = vmatpush1.msra.mxu0 0.0
        %645 = vmatprep.mubr.f32.mxu0 0.0
        %646 = vmatmul.mubr.f32.gmra.mrb[0].mxu0 %v554
        %v647 = vpop.f32.mrb[0].mxu0
        %v648 = vadd.f32 0.0, %v647
        %v649 = vpop.f32.mrb[0].mxu0
        %650 = vmatprep.mubr.f32.mxu0 0.0
        %651 = vmatmul.mubr.f32.gmra.mrb[0].mxu0 %v557
        %v652 = vpop.f32.mrb[0].mxu0
        %v653 = vadd.f32 0.0, %v652
        %v654 = vpop.f32.mrb[0].mxu0
        %655 = vmatprep.mubr.f32.mxu0 0.0
        %656 = vmatmul.mubr.f32.gmra.mrb[0].mxu0 %v560
        %v657 = vpop.f32.mrb[0].mxu0
        %v658 = vadd.f32 0.0, %v657
        %v659 = vpop.f32.mrb[0].mxu0
        %660 = vmatprep.mubr.f32.mxu0 0.0
        %661 = vmatmul.mubr.f32.gmra.mrb[0].mxu0 %v563
        %v662 = vpop.f32.mrb[0].mxu0
        %v663 = vadd.f32 0.0, %v662
        %v664 = vpop.f32.mrb[0].mxu0
        %665 = vmatprep.mubr.f32.mxu0 0.0
        %666 = vmatmul.mubr.f32.gmra.mrb[0].mxu0 %v566
        %v667 = vpop.f32.mrb[0].mxu0
        %v668 = vadd.f32 0.0, %v667
        %v669 = vpop.f32.mrb[0].mxu0
        %670 = vmatprep.mubr.f32.mxu0 0.0
        %671 = vmatmul.mubr.f32.gmra.mrb[0].mxu0 %v569
        %v672 = vpop.f32.mrb[0].mxu0
        %v673 = vadd.f32 0.0, %v672
        %v674 = vpop.f32.mrb[0].mxu0
        %675 = vmatprep.mubr.f32.mxu0 0.0
        %676 = vmatmul.mubr.f32.gmra.mrb[0].mxu0 %v572
        %v677 = vpop.f32.mrb[0].mxu0
        %v678 = vadd.f32 0.0, %v677
        %v679 = vpop.f32.mrb[0].mxu0
        %680 = vmatprep.mubr.f32.mxu0 0.0
        %681 = vmatmul.mubr.f32.gmra.mrb[0].mxu0 %v575
        %v682 = vpop.f32.mrb[0].mxu0
        %v683 = vadd.f32 0.0, %v682
        %v684 = vpop.f32.mrb[0].mxu0
        %685 = vdwg.mxu0
        %v686 = vadd.f32 %v648, %v653
        %v687 = vadd.f32 %v686, %v658
        %v688 = vadd.f32 %v687, %v663
        %v689 = vadd.f32 %v688, %v668
        %v690 = vadd.f32 %v689, %v673
        %v691 = vadd.f32 %v690, %v678
        %v692 = vadd.f32 %v691, %v683
        %v693 = vrot.slane %v692, 4
        %v694 = vadd.f32 %v692, %v693
        %v695 = vrot.slane %v694, 2
        %v696 = vadd.f32 %v694, %v695
        %v697 = vrot.slane %v696, 1
        %v698 = vadd.f32 %v696, %v697
        %v699 = vmul.f32 %v698, 0.015625
        %v700 = vsub.f32 %v648, %v699
        %v701 = vsub.f32 %v653, %v699
        %v702 = vsub.f32 %v658, %v699
        %v703 = vsub.f32 %v663, %v699
        %v704 = vsub.f32 %v668, %v699
        %v705 = vsub.f32 %v673, %v699
        %v706 = vsub.f32 %v678, %v699
        %v707 = vsub.f32 %v683, %v699
        %v708 = vmul.f32 %v700, %v700
        %v709 = vmul.f32 %v701, %v701
        %v710 = vmul.f32 %v702, %v702
        %v711 = vmul.f32 %v703, %v703
        %v712 = vmul.f32 %v704, %v704
        %v713 = vmul.f32 %v705, %v705
        %v714 = vmul.f32 %v706, %v706
        %v715 = vmul.f32 %v707, %v707
        %v716 = vadd.f32 %v708, %v709
        %v717 = vadd.f32 %v716, %v710
        %v718 = vadd.f32 %v717, %v711
        %v719 = vadd.f32 %v718, %v712
        %v720 = vadd.f32 %v719, %v713
        %v721 = vadd.f32 %v720, %v714
        %v722 = vadd.f32 %v721, %v715
        %v723 = vrot.slane %v722, 4
        %v724 = vadd.f32 %v722, %v723
        %v725 = vrot.slane %v724, 2
        %v726 = vadd.f32 %v724, %v725
        %v727 = vrot.slane %v726, 1
        %v728 = vadd.f32 %v726, %v727
        %v729 = vmul.f32 %v728, 0.015625
        %v730 = vadd.f32 %v729, 1e-05
        %v731 = vrsqrt.pop %v730
        %v732 = vmul.f32 %v700, %v731
        %v733 = vmul.f32 %v701, %v731
        %v734 = vmul.f32 %v702, %v731
        %v735 = vmul.f32 %v703, %v731
        %v736 = vmul.f32 %v704, %v731
        %v737 = vmul.f32 %v705, %v731
        %v738 = vmul.f32 %v706, %v731
        %v739 = vmul.f32 %v707, %v731
        %v740 = vmax.f32 %v732, 0.0
        %v741 = vmax.f32 %v733, 0.0
        %v742 = vmax.f32 %v734, 0.0
        %v743 = vmax.f32 %v735, 0.0
        %v744 = vmax.f32 %v736, 0.0
        %v745 = vmax.f32 %v737, 0.0
        %v746 = vmax.f32 %v738, 0.0
        %v747 = vmax.f32 %v739, 0.0
        %748 = vst [vmem:[%s136] sm:$0xff] %v740
        %749 = vst [vmem:[%s136 + $0x8] sm:$0xff] %v741
        %750 = vst [vmem:[%s136 + $0x10] sm:$0xff] %v742
        %751 = vst [vmem:[%s136 + $0x18] sm:$0xff] %v743
        %752 = vst [vmem:[%s136 + $0x20] sm:$0xff] %v744
        %753 = vst [vmem:[%s136 + $0x28] sm:$0xff] %v745
        %754 = vst [vmem:[%s136 + $0x30] sm:$0xff] %v746
        %755 = vst [vmem:[%s136 + $0x38] sm:$0xff] %v747
        %s756 = sand.u32 %s71, 1
        %s757 = scalar_lea.sflag [#allocation3], %s756
        %s758 = sand.u32 %s71, 1
        %s759 = smul.addr %s758, 64
        %s760 = scalar_lea.vmem [#allocation2], %s759
        // Predicated region
        $region29: #{tpu_custom_call.1} parent=27 // pred_check
          %p761 = pneg %p81
        $region30: #{tpu_custom_call.1} parent=27 // pred_check_branch
          %763 = sbr.rel (%p761) target = $region32
        $region31: #{tpu_custom_call.1} parent=27 // pred_region
          %s765 = ssub.s32 1024, 1024
          %766 = vsyncadd %s757, %s765
          %s767 = smul.addr %s16, 8
          %s768 = smul.addr %s767, 128
          %s769 = scalar_lea.hbm %s2, %s768
          %s770 = sshll.u32 %s760, 4
          %s771 = int_to_ptr.vmem [resolvable:$true] %s770
          %776 = dma.vmem_to_hbm [thread:$0]  %s771, 1024, %s769, %s757, 128, 128, 8
        $region32: #{tpu_custom_call.1} parent=27 // pred_fallthru
          _
      $region28: #{tpu_custom_call.1} parent=5 // pred_fallthru
        _
      %p777 = scmp.le.s32.totalorder 2, %s11
      // Predicated region
      $region33: #{tpu_custom_call.1} parent=5 // pred_check
        %p778 = pneg %p777
      $region34: #{tpu_custom_call.1} parent=5 // pred_check_branch
        %780 = sbr.rel (%p778) target = $region36
      $region35: #{tpu_custom_call.1} parent=5 // pred_region
        %s781 = ssub.s32 %s11, 2
        // Predicated region
        $region37: #{tpu_custom_call.1} parent=35 // pred_check
          %p782 = pneg %p87
        $region38: #{tpu_custom_call.1} parent=35 // pred_check_branch
          %784 = sbr.rel (%p782) target = $region40
        $region39: #{tpu_custom_call.1} parent=35 // pred_region
          %s785 = sand.u32 %s72, 1
          %s786 = scalar_lea.sflag [#allocation3], %s785
          %s787 = sand.u32 %s72, 1
          %s788 = smul.addr %s787, 64
          %s789 = scalar_lea.vmem [#allocation2], %s788
          %790 = dma.done %s786, 1024
        $region40: #{tpu_custom_call.1} parent=35 // pred_fallthru
          _
      $region36: #{tpu_custom_call.1} parent=5 // pred_fallthru
        _
    $region6: #{tpu_custom_call.1} parent=1 // loop_footer
      %s15 = sadd.s32 1, %s11
    $region7: #{tpu_custom_call.1} parent=1 // loop_footer_branch
      %10 = sbr.rel target = $region3
    $region8: #{tpu_custom_call.1} parent=1 // loop_exit
      _
    %791 = vsyncpa [#allocation3], 1
    %s792 = scalar_lea.sflag [#allocation3], 1
    %793 = vsyncpa %s792, 1

</llo_original>
